<compile_context>
chip_gen: v6e
topology: v6e:2x2x1
jax: 0.10.0
libtpu: 0.0.40
codegen_flags: <defaults>
</compile_context>

<pallas_src>
import numpy as np
import jax
import jax.numpy as jnp
from jax.experimental import pallas as pl
from jax.experimental.pallas import tpu as pltpu


def _round_up(x: int, m: int) -> int:
    return ((x + m - 1) // m) * m


_VMEM_BUDGET = 24 * 1024 * 1024   # double-buffered working-set cap (v7x-safe)
_VMEM_LIMIT = 32 * 1024 * 1024    # scoped-VMEM limit handed to Mosaic


def _plan(n, out_dim, *, tm, tn_max, tk, adj_dtype, xw_dtype):
    """Tile sizes + padded shapes for the adj @ xw stage (shared with prepare_adj)."""
    adj_b = jnp.dtype(adj_dtype).itemsize
    xw_b = jnp.dtype(xw_dtype).itemsize

    # Lane-dense output; tn == out_pad whenever it fits so adj streams exactly once.
    out_pad = _round_up(out_dim, 128)
    if out_pad <= tn_max:
        tn = out_pad
    else:
        tn = _round_up(tn_max, 128)
        out_pad = _round_up(out_pad, tn)

    n_row_pad = _round_up(n, 8)
    tm = min(tm, n_row_pad)
    # Prefer >=2 row tiles when the graph is big enough so both v7x TensorCores
    # get work under "parallel" semantics (harmless on single-TC chips).
    if tm == n_row_pad and n_row_pad >= 512:
        tm = _round_up(n_row_pad // 2, 8)

    tk = min(tk, _round_up(n, 128))

    def workset(tm_, tn_, tk_):
        # double-buffered adj + xw input tiles, double-buffered f32 output tile
        return 2 * (tm_ * tk_ * adj_b + tk_ * tn_ * xw_b + tm_ * tn_ * 4)

    while workset(tm, tn, tk) > _VMEM_BUDGET and tk > 128:
        tk = max(128, _round_up(tk // 2, 128))
    while workset(tm, tn, tk) > _VMEM_BUDGET and tm > 8:
        tm = max(8, _round_up(tm // 2, 8))

    n_rows = _round_up(n, tm)
    n_cols = _round_up(n, tk)
    return tm, tn, tk, n_rows, n_cols, out_pad


def prepare_adj(adj, out_dim, *, mxu_dtype=jnp.bfloat16, tm=512, tn_max=512, tk=2048):
    """Pad + cast the adjacency ONCE (tile-aligned, MXU dtype).

    Cache the result across training steps and pass it to graph_conv_sparse to
    avoid re-materializing a second full N^2 copy of adj on every call (which
    costs ~3x the adj HBM bytes of the kernel itself).
    """
    n = adj.shape[0]
    _, _, _, n_rows, n_cols, _ = _plan(
        n, out_dim, tm=tm, tn_max=tn_max, tk=tk,
        adj_dtype=mxu_dtype, xw_dtype=mxu_dtype)
    if adj.shape == (n_rows, n_cols) and adj.dtype == mxu_dtype:
        return adj
    return jnp.zeros((n_rows, n_cols), mxu_dtype).at[:n, :n].set(adj.astype(mxu_dtype))


# ---------------------------------------------------------------------------
# Stage 2 kernel: out = relu(adj @ xw), accumulating directly into the
# resident f32 output block across the K ("arbitrary") grid axis.
# ---------------------------------------------------------------------------
def _adj_matmul_relu_kernel(adj_ref, xw_ref, o_ref):
    k = pl.program_id(2)

    @pl.when(k == 0)
    def _():
        o_ref[...] = jnp.zeros_like(o_ref)

    o_ref[...] += jnp.dot(
        adj_ref[...], xw_ref[...], preferred_element_type=jnp.float32
    )

    @pl.when(k == pl.num_programs(2) - 1)
    def _():
        # ReLU epilogue in f32 (v5e VPU has no bf16 path).
        o_ref[...] = jnp.maximum(o_ref[...], 0.0)


def graph_conv_sparse(
    x,
    weight,
    adj,
    *,
    mxu_dtype=jnp.bfloat16,   # bf16 halves the dominant adj HBM stream
    tm: int = 512,            # output-row tile (multiple of 8; 256-multiple for v6e/v7x MXU)
    tn_max: int = 512,        # cap on output-col tile (tn == out_pad when it fits)
    tk: int = 2048,           # reduction tile over adj columns
):
    """relu(adj @ (x @ weight)) with a Pallas TPU kernel. Returns f32 (N, out_dim).

    `adj` may be the raw (N, N) adjacency (any float dtype) or a pre-prepared,
    padded-and-cast array from prepare_adj() (preferred in training loops).
    """
    n, in_dim = x.shape
    out_dim = weight.shape[1]
    assert weight.shape[0] == in_dim

    tm, tn, tk, n_rows, n_cols, out_pad = _plan(
        n, out_dim, tm=tm, tn_max=tn_max, tk=tk,
        adj_dtype=mxu_dtype, xw_dtype=mxu_dtype)

    # ---- Stage 1: xw = x @ W.  K = input_dim is tiny -> plain XLA dot. ----
    xw = jnp.dot(x.astype(jnp.float32), weight.astype(jnp.float32),
                 preferred_element_type=jnp.float32)
    xw_p = (jnp.zeros((n_cols, out_pad), mxu_dtype)
            .at[:n, :out_dim].set(xw.astype(mxu_dtype)))

    # ---- adj: skip the N^2 pad/cast copy when a prepared adjacency is given. ----
    if adj.shape == (n_rows, n_cols) and adj.dtype == mxu_dtype:
        adj_p = adj
    else:
        assert adj.shape == (n, n), f"adj shape {adj.shape} != ({n}, {n})"
        adj_p = (jnp.zeros((n_rows, n_cols), mxu_dtype)
                 .at[:n, :n].set(adj.astype(mxu_dtype)))

    num_i, num_j, num_k = n_rows // tm, out_pad // tn, n_cols // tk
    itemsize = jnp.dtype(mxu_dtype).itemsize
    cost = pl.CostEstimate(
        flops=2 * n_rows * n_cols * out_pad,
        transcendentals=0,
        bytes_accessed=(
            num_j * n_rows * n_cols * itemsize      # adj (streamed once when tn == out_pad)
            + num_i * n_cols * out_pad * itemsize   # xw re-read once per row tile
            + n_rows * out_pad * 4                  # f32 output written once
        ),
    )

    # TODO(synk): for genuinely sparse adjacencies, add a per-(row-tile, col-tile)
    # nonzero map via pltpu.PrefetchScalarGridSpec and skip / remap all-zero k tiles.
    # TODO(synk): v7x fp8(e4m3) adj stream and v5e/v6e int8 adj (+ per-row scale
    # folded into the ReLU epilogue) would halve the adj HBM bytes again.
    out_p = pl.pallas_call(
        _adj_matmul_relu_kernel,
        out_shape=jax.ShapeDtypeStruct((n_rows, out_pad), jnp.float32),
        grid=(num_i, num_j, num_k),
        in_specs=[
            pl.BlockSpec((tm, tk), lambda i, j, k: (i, k)),   # adj tile
            pl.BlockSpec((tk, tn), lambda i, j, k: (k, j)),   # xw tile
        ],
        out_specs=pl.BlockSpec((tm, tn), lambda i, j, k: (i, j)),
        compiler_params=pltpu.CompilerParams(
            dimension_semantics=("parallel", "parallel", "arbitrary"),
            vmem_limit_bytes=_VMEM_LIMIT,
        ),
        cost_estimate=cost,
    )(adj_p, xw_p)

    return out_p[:n, :out_dim]


# ---------------------------------------------------------------------------
# Helpers / reference
# ---------------------------------------------------------------------------
def glorot_init(key, input_dim, output_dim):
    # Matches the PyTorch glorot_init: U(-r, r), r = sqrt(6/(in+out)).
    init_range = np.sqrt(6.0 / (input_dim + output_dim))
    u = jax.random.uniform(key, (input_dim, output_dim), dtype=jnp.float32)
    return u * 2.0 * init_range - init_range


def reference(x, weight, adj):
    return jnp.maximum(adj @ (x @ weight), 0.0)


if __name__ == "__main__":
    key = jax.random.PRNGKey(0)
    k_w, k_x, k_a = jax.random.split(key, 3)

    n = 16           # number of graph nodes
    input_dim = 8    # input feature dim
    output_dim = 32  # output feature dim

    weight = glorot_init(k_w, input_dim, output_dim)
    x = jax.random.normal(k_x, (n, input_dim), dtype=jnp.float32)

    # Deterministic dense "adjacency": symmetric, self-loops, row-normalized.
    a_raw = (jax.random.uniform(k_a, (n, n)) > 0.7).astype(jnp.float32)
    a_sym = jnp.clip(a_raw + a_raw.T, 0.0, 1.0) + jnp.eye(n, dtype=jnp.float32)
    adj = a_sym / jnp.sum(a_sym, axis=1, keepdims=True)

    ref = reference(x, weight, adj)

    # Exactness check: f32 MXU path must match the reference tightly.
    out_f32 = jax.block_until_ready(
        graph_conv_sparse(x, weight, adj, mxu_dtype=jnp.float32)
    )
    np.testing.assert_allclose(np.asarray(out_f32), np.asarray(ref),
                               rtol=1e-5, atol=1e-5)

    # Default fast path: bf16 adj/xw stream, f32 accumulate + relu.
    out_bf16 = jax.block_until_ready(graph_conv_sparse(x, weight, adj))
    np.testing.assert_allclose(np.asarray(out_bf16), np.asarray(ref),
                               rtol=3e-2, atol=3e-2)

    # Pre-prepared (padded + cast) adjacency: zero-copy path inside the wrapper.
    adj_prep = prepare_adj(adj, output_dim)
    out_prep = jax.block_until_ready(graph_conv_sparse(x, weight, adj_prep))
    np.testing.assert_allclose(np.asarray(out_prep), np.asarray(out_bf16),
                               rtol=0, atol=0)

    print("KERNEL_OK")
</pallas_src>

<mosaic_0001>
module attributes {stable_mosaic.version = 11 : i64} {
  func.func @_adj_matmul_relu_kernel(%arg0: i32, %arg1: i32, %arg2: i32, %arg3: memref<16x128xf32, #tpu.memory_space<vmem>>, %arg4: memref<128x128xf32, #tpu.memory_space<vmem>>, %arg5: memref<16x128xf32, #tpu.memory_space<vmem>>) attributes {dimension_semantics = [#tpu.dimension_semantics<parallel>, #tpu.dimension_semantics<parallel>, #tpu.dimension_semantics<arbitrary>], iteration_bounds = array<i64: 1, 1, 1>, scalar_prefetch = 0 : i64, scratch_operands = 0 : i64, tpu.core_type = #tpu.core_type<tc>, window_params = [{transform_indices = @transform_0, window_bounds = array<i64: 16, 128>}, {transform_indices = @transform_1, window_bounds = array<i64: 128, 128>}, {transform_indices = @transform_2, window_bounds = array<i64: 16, 128>}]} {
    %c0_i32 = arith.constant 0 : i32
    %0 = arith.cmpi eq, %arg2, %c0_i32 : i32
    %1 = arith.extui %0 : i1 to i32
    %c0_i32_0 = arith.constant 0 : i32
    %2 = arith.cmpi ne, %1, %c0_i32_0 : i32
    scf.if %2 {
      %cst_10 = arith.constant 0.000000e+00 : f32
      %12 = vector.broadcast %cst_10 : f32 to vector<16x128xf32>
      %c0_11 = arith.constant 0 : index
      %c0_12 = arith.constant 0 : index
      %13 = vector.load %arg5[%c0_11, %c0_12] : memref<16x128xf32, #tpu.memory_space<vmem>>, vector<16x128xf32>
      tpu.vector_store %arg5[%c0_11, %c0_12], %12 {strides = array<i32>} : memref<16x128xf32, #tpu.memory_space<vmem>>, vector<16x128xf32>,
    } else {
    }
    %c0 = arith.constant 0 : index
    %c0_1 = arith.constant 0 : index
    %3 = vector.load %arg5[%c0, %c0_1] : memref<16x128xf32, #tpu.memory_space<vmem>>, vector<16x128xf32>
    %c0_2 = arith.constant 0 : index
    %c0_3 = arith.constant 0 : index
    %4 = vector.load %arg3[%c0_2, %c0_3] : memref<16x128xf32, #tpu.memory_space<vmem>>, vector<16x128xf32>
    %c0_4 = arith.constant 0 : index
    %c0_5 = arith.constant 0 : index
    %5 = vector.load %arg4[%c0_4, %c0_5] : memref<128x128xf32, #tpu.memory_space<vmem>>, vector<128x128xf32>
    %cst = arith.constant dense<0.000000e+00> : vector<16x128xf32>
    %6 = tpu.matmul %4, %5, %cst {dimension_numbers = #tpu.dot_dimension_numbers<[1], [0], [0], [1], [0, 0, 1, 1], [], []>} : vector<16x128xf32>, vector<128x128xf32>, vector<16x128xf32> -> vector<16x128xf32>
    %7 = arith.addf %3, %6 : vector<16x128xf32>
    %c0_6 = arith.constant 0 : index
    %c0_7 = arith.constant 0 : index
    %8 = vector.load %arg5[%c0_6, %c0_7] : memref<16x128xf32, #tpu.memory_space<vmem>>, vector<16x128xf32>
    tpu.vector_store %arg5[%c0_6, %c0_7], %7 {strides = array<i32>} : memref<16x128xf32, #tpu.memory_space<vmem>>, vector<16x128xf32>,
    %c0_i32_8 = arith.constant 0 : i32
    %9 = arith.cmpi eq, %arg2, %c0_i32_8 : i32
    %10 = arith.extui %9 : i1 to i32
    %c0_i32_9 = arith.constant 0 : i32
    %11 = arith.cmpi ne, %10, %c0_i32_9 : i32
    scf.if %11 {
      %c0_10 = arith.constant 0 : index
      %c0_11 = arith.constant 0 : index
      %12 = vector.load %arg5[%c0_10, %c0_11] : memref<16x128xf32, #tpu.memory_space<vmem>>, vector<16x128xf32>
      %cst_12 = arith.constant 0.000000e+00 : f32
      %13 = vector.broadcast %cst_12 : f32 to vector<16x128xf32>
      %14 = arith.maximumf %12, %13 : vector<16x128xf32>
      %c0_13 = arith.constant 0 : index
      %c0_14 = arith.constant 0 : index
      %15 = vector.load %arg5[%c0_13, %c0_14] : memref<16x128xf32, #tpu.memory_space<vmem>>, vector<16x128xf32>
      tpu.vector_store %arg5[%c0_13, %c0_14], %14 {strides = array<i32>} : memref<16x128xf32, #tpu.memory_space<vmem>>, vector<16x128xf32>,
    } else {
    }
    return
  }
  func.func @transform_0(%arg0: i32, %arg1: i32, %arg2: i32) -> (i32, i32) {
    %c0_i32 = arith.constant 0 : i32
    return %arg0, %arg2 : i32, i32
  }
  func.func @transform_1(%arg0: i32, %arg1: i32, %arg2: i32) -> (i32, i32) {
    %c0_i32 = arith.constant 0 : i32
    return %arg2, %arg1 : i32, i32
  }
  func.func @transform_2(%arg0: i32, %arg1: i32, %arg2: i32) -> (i32, i32) {
    %c0_i32 = arith.constant 0 : i32
    return %arg0, %arg1 : i32, i32
  }
}

</mosaic_0001>

<llo_original>
// kernel: tpu_custom_call.1
$region0: #{tpu_custom_call.1}
  #allocation0 [shape = 'u32[]', space=smem, size = 0x4, offset = 0x4, fixed_abs, tag = 'smem constant byte address 0x4 - core index']
  #allocation1 [shape = 'u32[144,128]{1,0:T(1,128)}', space=vmem, size = 0x12000, scoped, tag = 'internal scratch']
  %s0 = inlined_call_operand.hbm [shape: f32[16,128], index: 0, kind: input, shape index: {}]
  %s1 = inlined_call_operand.hbm [shape: f32[128,128], index: 1, kind: input, shape index: {}]
  %s2 = inlined_call_operand.hbm [shape: f32[16,128], index: 2, kind: output, shape index: {}]
  %s3 = sld [smem:[#allocation0]]
  $region34: #{tpu_custom_call.1} parent=0
    _
  %s5 = ssub.s32 1, %s3
  %s6 = scalar_select 0, %s5, %s3
  $region1: #{tpu_custom_call.1} parent=0
    #allocation2 [shape = 'u8[8192]{0}', space=vmem, size = 0x2000, scoped, tag = 'input window, operand 0, single buffered']
    #allocation3 [shape = 's32[1]{0}', space=sflag, size = 0x4, scoped, tag = 'scoped memory for tpu_custom_call.1']
    #allocation4 [shape = 's32[1]{0}', space=sflag, size = 0x4, scoped, tag = 'scoped memory for tpu_custom_call.1']
    #allocation5 [shape = 'u8[65536]{0}', space=vmem, size = 0x10000, scoped, tag = 'input window, operand 1, single buffered']
    #allocation6 [shape = 's32[1]{0}', space=sflag, size = 0x4, scoped, tag = 'scoped memory for tpu_custom_call.1']
    #allocation7 [shape = 'u8[8192]{0}', space=vmem, size = 0x2000, scoped, tag = 'output window, operand 0, single buffered']
    %7 = vsyncpa [#allocation3], 0
    %8 = vsyncpa [#allocation6], 0
    %9 = vsyncpa [#allocation4], 0
    // Predicated region
    $region2: #{tpu_custom_call.1} parent=1 // pred_check
      _
    $region3: #{tpu_custom_call.1} parent=1 // pred_check_branch
      %11 = sbr.rel (0) target = $region5
    $region4: #{tpu_custom_call.1} parent=1 // pred_region
      %s13 = ssub.s32 256, 256
      %14 = vsyncadd [#allocation3], %s13
      %s15 = sshll.u32 [#allocation2], 4
      %s16 = int_to_ptr.vmem [resolvable:$true] %s15
      %21 = dma.hbm_to_vmem [thread:$0]  %s0, 256, %s16, [#allocation3], 128, 128, 8
    $region5: #{tpu_custom_call.1} parent=1 // pred_fallthru
      _
    // Predicated region
    $region6: #{tpu_custom_call.1} parent=1 // pred_check
      _
    $region7: #{tpu_custom_call.1} parent=1 // pred_check_branch
      %23 = sbr.rel (0) target = $region9
    $region8: #{tpu_custom_call.1} parent=1 // pred_region
      %s25 = ssub.s32 2048, 2048
      %26 = vsyncadd [#allocation6], %s25
      %s27 = sshll.u32 [#allocation5], 4
      %s28 = int_to_ptr.vmem [resolvable:$true] %s27
      %33 = dma.hbm_to_vmem [thread:$0]  %s1, 2048, %s28, [#allocation6], 128, 128, 8
    $region9: #{tpu_custom_call.1} parent=1 // pred_fallthru
      _
    // Predicated region
    $region10: #{tpu_custom_call.1} parent=1 // pred_check
      _
    $region11: #{tpu_custom_call.1} parent=1 // pred_check_branch
      %35 = sbr.rel (0) target = $region13
    $region12: #{tpu_custom_call.1} parent=1 // pred_region
      %36 = dma.done [#allocation3], 256
    $region13: #{tpu_custom_call.1} parent=1 // pred_fallthru
      _
    // Predicated region
    $region14: #{tpu_custom_call.1} parent=1 // pred_check
      _
    $region15: #{tpu_custom_call.1} parent=1 // pred_check_branch
      %38 = sbr.rel (0) target = $region17
    $region16: #{tpu_custom_call.1} parent=1 // pred_region
      %39 = dma.done [#allocation6], 2048
    $region17: #{tpu_custom_call.1} parent=1 // pred_fallthru
      _
    %p40 = scmp.eq.s32.totalorder 0, 0
    // Predicated region
    $region18: #{tpu_custom_call.1} parent=1 // pred_check
      %p41 = pneg %p40
    $region19: #{tpu_custom_call.1} parent=1 // pred_check_branch
      %43 = sbr.rel (%p41) target = $region21
    $region20: #{tpu_custom_call.1} parent=1 // pred_region
      %44 = vst [vmem:[#allocation7] sm:$0xff] 0.0
      %45 = vst [vmem:[#allocation7 + $0x8] sm:$0xff] 0.0
    $region21: #{tpu_custom_call.1} parent=1 // pred_fallthru
      _
    %v46 = vld [vmem:[#allocation7] sm:$0xff]
    %v47 = vld [vmem:[#allocation7 + $0x8] sm:$0xff]
    %v48 = vld [vmem:[#allocation2] sm:$0xff]
    %v49 = vld [vmem:[#allocation2 + $0x8] sm:$0xff]
    %v50 = vld [vmem:[#allocation5] sm:$0xff]
    %v51 = vld [vmem:[#allocation5 + $0x8] sm:$0xff]
    %v52 = vld [vmem:[#allocation5 + $0x10] sm:$0xff]
    %v53 = vld [vmem:[#allocation5 + $0x18] sm:$0xff]
    %v54 = vld [vmem:[#allocation5 + $0x20] sm:$0xff]
    %v55 = vld [vmem:[#allocation5 + $0x28] sm:$0xff]
    %v56 = vld [vmem:[#allocation5 + $0x30] sm:$0xff]
    %v57 = vld [vmem:[#allocation5 + $0x38] sm:$0xff]
    %v58 = vld [vmem:[#allocation5 + $0x40] sm:$0xff]
    %v59 = vld [vmem:[#allocation5 + $0x48] sm:$0xff]
    %v60 = vld [vmem:[#allocation5 + $0x50] sm:$0xff]
    %v61 = vld [vmem:[#allocation5 + $0x58] sm:$0xff]
    %v62 = vld [vmem:[#allocation5 + $0x60] sm:$0xff]
    %v63 = vld [vmem:[#allocation5 + $0x68] sm:$0xff]
    %v64 = vld [vmem:[#allocation5 + $0x70] sm:$0xff]
    %v65 = vld [vmem:[#allocation5 + $0x78] sm:$0xff]
    %66 = vmatprep.subr.mxu0 0.0
    %67 = vmatpush1.msra.mxu0 %v65
    %68 = vmatprep.subr.mxu0 0.0
    %69 = vmatpush1.msra.mxu0 %v64
    %70 = vmatprep.subr.mxu0 0.0
    %71 = vmatpush1.msra.mxu0 %v63
    %72 = vmatprep.subr.mxu0 0.0
    %73 = vmatpush1.msra.mxu0 %v62
    %74 = vmatprep.subr.mxu0 0.0
    %75 = vmatpush1.msra.mxu0 %v61
    %76 = vmatprep.subr.mxu0 0.0
    %77 = vmatpush1.msra.mxu0 %v60
    %78 = vmatprep.subr.mxu0 0.0
    %79 = vmatpush1.msra.mxu0 %v59
    %80 = vmatprep.subr.mxu0 0.0
    %81 = vmatpush1.msra.mxu0 %v58
    %82 = vmatprep.subr.mxu0 0.0
    %83 = vmatpush1.msra.mxu0 %v57
    %84 = vmatprep.subr.mxu0 0.0
    %85 = vmatpush1.msra.mxu0 %v56
    %86 = vmatprep.subr.mxu0 0.0
    %87 = vmatpush1.msra.mxu0 %v55
    %88 = vmatprep.subr.mxu0 0.0
    %89 = vmatpush1.msra.mxu0 %v54
    %90 = vmatprep.subr.mxu0 0.0
    %91 = vmatpush1.msra.mxu0 %v53
    %92 = vmatprep.subr.mxu0 0.0
    %93 = vmatpush1.msra.mxu0 %v52
    %94 = vmatprep.subr.mxu0 0.0
    %95 = vmatpush1.msra.mxu0 %v51
    %96 = vmatprep.subr.mxu0 0.0
    %97 = vmatpush1.msra.mxu0 %v50
    %98 = vmatprep.subr.mxu0 0.0
    %99 = vmatpush2.msra.mxu0 0.0
    %100 = vmatprep.subr.mxu0 0.0
    %101 = vmatpush2.msra.mxu0 0.0
    %102 = vmatprep.subr.mxu0 0.0
    %103 = vmatpush2.msra.mxu0 0.0
    %104 = vmatprep.subr.mxu0 0.0
    %105 = vmatpush2.msra.mxu0 0.0
    %106 = vmatprep.subr.mxu0 0.0
    %107 = vmatpush2.msra.mxu0 0.0
    %108 = vmatprep.subr.mxu0 0.0
    %109 = vmatpush2.msra.mxu0 0.0
    %110 = vmatprep.subr.mxu0 0.0
    %111 = vmatpush2.msra.mxu0 0.0
    %112 = vmatprep.subr.mxu0 0.0
    %113 = vmatpush2.msra.mxu0 0.0
    %114 = vmatprep.subr.mxu0 0.0
    %115 = vmatpush2.msra.mxu0 0.0
    %116 = vmatprep.subr.mxu0 0.0
    %117 = vmatpush2.msra.mxu0 0.0
    %118 = vmatprep.subr.mxu0 0.0
    %119 = vmatpush2.msra.mxu0 0.0
    %120 = vmatprep.subr.mxu0 0.0
    %121 = vmatpush2.msra.mxu0 0.0
    %122 = vmatprep.subr.mxu0 0.0
    %123 = vmatpush2.msra.mxu0 0.0
    %124 = vmatprep.subr.mxu0 0.0
    %125 = vmatpush2.msra.mxu0 0.0
    %126 = vmatprep.subr.mxu0 0.0
    %127 = vmatpush2.msra.mxu0 0.0
    %128 = vmatprep.subr.mxu0 0.0
    %129 = vmatpush2.msra.mxu0 0.0
    %130 = vmatprep.mubr.f32.mxu0 0.0
    %131 = vmatmul.mubr.f32.gmra.mxu0 %v48
    %v132 = vpop.f32.mrf.mxu0
    %v133 = vadd.f32 0.0, %v132
    %v134 = vpop.f32.mrf.mxu0
    %135 = vmatprep.mubr.f32.mxu0 0.0
    %136 = vmatmul.mubr.f32.gmra.mxu0 %v49
    %v137 = vpop.f32.mrf.mxu0
    %v138 = vadd.f32 0.0, %v137
    %v139 = vpop.f32.mrf.mxu0
    %140 = vdwg.mxu0
    %v141 = vadd.f32 %v46, %v133
    %v142 = vadd.f32 %v47, %v138
    %143 = vst [vmem:[#allocation7] sm:$0xff] %v141
    %144 = vst [vmem:[#allocation7 + $0x8] sm:$0xff] %v142
    // Predicated region
    $region22: #{tpu_custom_call.1} parent=1 // pred_check
      %p145 = pneg %p40
    $region23: #{tpu_custom_call.1} parent=1 // pred_check_branch
      %147 = sbr.rel (%p145) target = $region25
    $region24: #{tpu_custom_call.1} parent=1 // pred_region
      %v148 = vld [vmem:[#allocation7] sm:$0xff]
      %v149 = vld [vmem:[#allocation7 + $0x8] sm:$0xff]
      %v150 = vmax.f32 %v148, 0.0
      %v151 = vmax.f32 %v149, 0.0
      %152 = vst [vmem:[#allocation7] sm:$0xff] %v150
      %153 = vst [vmem:[#allocation7 + $0x8] sm:$0xff] %v151
    $region25: #{tpu_custom_call.1} parent=1 // pred_fallthru
      _
    // Predicated region
    $region26: #{tpu_custom_call.1} parent=1 // pred_check
      _
    $region27: #{tpu_custom_call.1} parent=1 // pred_check_branch
      %155 = sbr.rel (0) target = $region29
    $region28: #{tpu_custom_call.1} parent=1 // pred_region
      %s157 = ssub.s32 256, 256
      %158 = vsyncadd [#allocation4], %s157
      %s159 = sshll.u32 [#allocation7], 4
      %s160 = int_to_ptr.vmem [resolvable:$true] %s159
      %165 = dma.vmem_to_hbm [thread:$0]  %s160, 256, %s2, [#allocation4], 128, 128, 8
    $region29: #{tpu_custom_call.1} parent=1 // pred_fallthru
      _
    // Predicated region
    $region30: #{tpu_custom_call.1} parent=1 // pred_check
      _
    $region31: #{tpu_custom_call.1} parent=1 // pred_check_branch
      %167 = sbr.rel (0) target = $region33
    $region32: #{tpu_custom_call.1} parent=1 // pred_region
      %168 = dma.done [#allocation4], 256
    $region33: #{tpu_custom_call.1} parent=1 // pred_fallthru
      _
    %169 = vsyncpa [#allocation3], 1
    %170 = vsyncpa [#allocation6], 1
    %171 = vsyncpa [#allocation4], 1

</llo_original>
